<compile_context>
chip_gen: v5e
topology: v5e:2x2
jax: 0.10.0
libtpu: 0.0.40
codegen_flags: <defaults>
</compile_context>

<pallas_src>
import jax
import jax.numpy as jnp
from jax.experimental import pallas as pl
from jax.experimental.pallas import tpu as pltpu

LANE = 128  # TPU vreg lane width


def _round_up(n, m):
    return (n + m - 1) // m * m


# ----------------------------- kernels -------------------------------------

def _cls_kernel(x_ref, w_ref, b_ref, o_ref):
    # o = x @ W + b     (W pre-transposed + zero-padded to [F, O_pad])
    acc = jnp.dot(x_ref[...], w_ref[...], preferred_element_type=jnp.float32)
    o_ref[...] = (acc + b_ref[...]).astype(o_ref.dtype)


def _pf_kernel(x_ref, w_ref, b_ref, o_ref):
    # Fused mu/sigma: w_ref is [F, 2*O_pad] = [mu block | log-sigma block].
    # One MXU pass; exp (EUP slot) only on the sigma lane block; both halves
    # land in ONE contiguous [B, 2*O_pad] output slab (single writeback).
    acc = jnp.dot(x_ref[...], w_ref[...], preferred_element_type=jnp.float32)
    acc = acc + b_ref[...]
    o_pad = o_ref.shape[-1] // 2
    # Both stores hit full 128-lane-aligned blocks -> unmasked vst.
    o_ref[:, :o_pad] = acc[:, :o_pad].astype(o_ref.dtype)
    o_ref[:, o_pad:] = jnp.exp(acc[:, o_pad:]).astype(o_ref.dtype)


# ----------------------------- pallas_call wrappers -------------------------

def _vmem_spec():
    # Whole array resident in VMEM, no grid / no pipelining machinery
    # (launch-bound shape; per-grid-step overhead would dominate).
    return pl.BlockSpec(memory_space=pltpu.MemorySpace.VMEM)


def _cost(B, F, N, itemsize, transcendentals=0):
    return pl.CostEstimate(
        flops=2 * B * F * N,
        transcendentals=transcendentals,
        bytes_accessed=(B * F + F * N + N + B * N) * itemsize,
    )


def _cls_call(x, w_pad, b_pad):
    B, F = x.shape
    o_pad = w_pad.shape[1]
    itemsize = jnp.dtype(x.dtype).itemsize
    return pl.pallas_call(
        _cls_kernel,
        out_shape=jax.ShapeDtypeStruct((B, o_pad), x.dtype),
        in_specs=[_vmem_spec(), _vmem_spec(), _vmem_spec()],
        out_specs=_vmem_spec(),
        cost_estimate=_cost(B, F, o_pad, itemsize),
    )(x, w_pad, b_pad)


def _pf_call(x, w_cat, b_cat):
    B, F = x.shape
    o2 = w_cat.shape[1]  # 2 * O_pad
    itemsize = jnp.dtype(x.dtype).itemsize
    return pl.pallas_call(
        _pf_kernel,
        out_shape=jax.ShapeDtypeStruct((B, o2), x.dtype),
        in_specs=[_vmem_spec(), _vmem_spec(), _vmem_spec()],
        out_specs=_vmem_spec(),
        cost_estimate=_cost(B, F, o2, itemsize, transcendentals=B * (o2 // 2)),
    )(x, w_cat, b_cat)


# ----------------------------- module --------------------------------------

class LearningMachine:
    """JAX/Pallas port of the GDU LearningMachine forward pass.

    Parameters are packed ONCE at construction (not per call):
      classification:            W    -> [F, O_pad]     (zero-padded to 128 lanes)
      probabilistic_forecasting: Wcat -> [F, 2*O_pad]   (mu block | sigma block)

    Interfaces (fast -> slow):
      forward_padded() : lane-dense padded slabs, no post-kernel slice (hot path)
      forward_parts()  : live O columns only (lane-sparse slice)
      __call__()       : exact PyTorch layout, export boundary only
    """

    def __init__(self, feature_vector_size, output_size, task, key,
                 dtype=jnp.float32):
        self.task = task
        self.F = feature_vector_size
        self.O = output_size
        self.O_pad = _round_up(max(output_size, LANE), LANE)
        bound = 1.0 / (feature_vector_size ** 0.5)  # nn.Linear default init range

        def linear_params(k):
            kw, kb = jax.random.split(k)
            w = jax.random.uniform(kw, (self.F, self.O),
                                   minval=-bound, maxval=bound, dtype=dtype)
            b = jax.random.uniform(kb, (self.O,),
                                   minval=-bound, maxval=bound, dtype=dtype)
            return w, b

        if task == "classification":
            self.w, self.b = linear_params(key)
            w_pad = jnp.zeros((self.F, self.O_pad), dtype).at[:, :self.O].set(self.w)
            b_pad = jnp.zeros((1, self.O_pad), dtype).at[0, :self.O].set(self.b)
            self.w_pad, self.b_pad = w_pad, b_pad
        elif task == "probabilistic_forecasting":
            k_mu, k_sig = jax.random.split(key)
            self.w_mu, self.b_mu = linear_params(k_mu)
            self.w_sig, self.b_sig = linear_params(k_sig)
            w_cat = jnp.zeros((self.F, 2 * self.O_pad), dtype)
            w_cat = w_cat.at[:, :self.O].set(self.w_mu)
            w_cat = w_cat.at[:, self.O_pad:self.O_pad + self.O].set(self.w_sig)
            b_cat = jnp.zeros((1, 2 * self.O_pad), dtype)
            b_cat = b_cat.at[0, :self.O].set(self.b_mu)
            b_cat = b_cat.at[0, self.O_pad:self.O_pad + self.O].set(self.b_sig)
            self.w_cat, self.b_cat = w_cat, b_cat
        else:
            raise ValueError(f"unknown task: {task}")

    # Hot path: lane-dense padded slabs, NO post-kernel slice.  Padded columns
    # hold deterministic bias / exp(bias)=1 values; mask at the loss if needed.
    def forward_padded(self, x_tilde):
        if self.task == "classification":
            return (_cls_call(x_tilde, self.w_pad, self.b_pad),)       # ([B, O_pad],)
        out = _pf_call(x_tilde, self.w_cat, self.b_cat)                # [B, 2*O_pad]
        return out[:, :self.O_pad], out[:, self.O_pad:]                # 128-lane split

    # Live columns only (introduces a lane-sparse [B, O] slice).
    def forward_parts(self, x_tilde):
        if self.task == "classification":
            (y_pad,) = self.forward_padded(x_tilde)
            return (y_pad[:, :self.O],)
        mu_pad, sig_pad = self.forward_padded(x_tilde)
        return mu_pad[:, :self.O], sig_pad[:, :self.O]

    # PyTorch-equivalent forward.  Export-boundary only: the trailing dim of
    # 1/2 pads to 128 lanes in every downstream TPU op -- keep TPU-side
    # consumers on forward_padded().
    def __call__(self, x_tilde):
        if self.task == "classification":
            (y,) = self.forward_parts(x_tilde)
            return y[:, :, None]                      # unsqueeze(dim=2) -> [B, O, 1]
        mu, sigma = self.forward_parts(x_tilde)
        return jnp.stack([mu, sigma], axis=2)         # torch.stack dim=2 -> [B, O, 2]


# ----------------------------- main ----------------------------------------

if __name__ == "__main__":
    B, F, O = 8, 32, 8  # batch (one f32 vreg row-group), feature_vector_size, output_size
    key = jax.random.PRNGKey(0)
    k_x, k_cls, k_pf = jax.random.split(key, 3)

    x = jax.random.normal(k_x, (B, F), dtype=jnp.float32)

    # --- classification branch ---
    lm_cls = LearningMachine(F, O, "classification", k_cls)
    y_cls = jax.block_until_ready(lm_cls(x))
    assert y_cls.shape == (B, O, 1)
    ref_cls = (x @ lm_cls.w + lm_cls.b[None, :])[:, :, None]
    assert jnp.allclose(y_cls, ref_cls, atol=1e-5, rtol=1e-5)

    # --- probabilistic_forecasting branch ---
    lm_pf = LearningMachine(F, O, "probabilistic_forecasting", k_pf)
    y_pf = jax.block_until_ready(lm_pf(x))
    assert y_pf.shape == (B, O, 2)
    ref_mu = x @ lm_pf.w_mu + lm_pf.b_mu[None, :]
    ref_sig = jnp.exp(x @ lm_pf.w_sig + lm_pf.b_sig[None, :])
    ref_pf = jnp.stack([ref_mu, ref_sig], axis=2)
    assert jnp.allclose(y_pf, ref_pf, atol=1e-5, rtol=1e-5)

    # --- hot-path padded-slab interface (lane-dense, no slicing) ---
    mu_pad, sig_pad = jax.block_until_ready(lm_pf.forward_padded(x))
    assert mu_pad.shape == (B, lm_pf.O_pad) and sig_pad.shape == (B, lm_pf.O_pad)
    assert jnp.allclose(mu_pad[:, :O], ref_mu, atol=1e-5, rtol=1e-5)
    assert jnp.allclose(sig_pad[:, :O], ref_sig, atol=1e-5, rtol=1e-5)
    # padded sigma columns are exp(0) = 1 (deterministic, maskable at the loss)
    assert jnp.allclose(sig_pad[:, O:], 1.0, atol=1e-6)

    print("KERNEL_OK")
</pallas_src>

<mosaic_0001>
module attributes {stable_mosaic.version = 11 : i64} {
  func.func @_cls_kernel(%arg0: memref<8x32xf32, #tpu.memory_space<vmem>>, %arg1: memref<32x128xf32, #tpu.memory_space<vmem>>, %arg2: memref<1x128xf32, #tpu.memory_space<vmem>>, %arg3: memref<8x128xf32, #tpu.memory_space<vmem>>) attributes {dimension_semantics = [], scalar_prefetch = 0 : i64, scratch_operands = 0 : i64, tpu.core_type = #tpu.core_type<tc>} {
    %c0 = arith.constant 0 : index
    %c0_0 = arith.constant 0 : index
    %0 = vector.load %arg0[%c0, %c0_0] : memref<8x32xf32, #tpu.memory_space<vmem>>, vector<8x32xf32>
    %c0_1 = arith.constant 0 : index
    %c0_2 = arith.constant 0 : index
    %1 = vector.load %arg1[%c0_1, %c0_2] : memref<32x128xf32, #tpu.memory_space<vmem>>, vector<32x128xf32>
    %cst = arith.constant dense<0.000000e+00> : vector<8x128xf32>
    %2 = tpu.matmul %0, %1, %cst {dimension_numbers = #tpu.dot_dimension_numbers<[1], [0], [0], [1], [0, 0, 1, 1], [], []>} : vector<8x32xf32>, vector<32x128xf32>, vector<8x128xf32> -> vector<8x128xf32>
    %c0_3 = arith.constant 0 : index
    %c0_4 = arith.constant 0 : index
    %3 = vector.load %arg2[%c0_3, %c0_4] : memref<1x128xf32, #tpu.memory_space<vmem>>, vector<1x128xf32>
    %4 = vector.broadcast %3 : vector<1x128xf32> to vector<8x128xf32>
    %5 = arith.addf %2, %4 : vector<8x128xf32>
    %c0_5 = arith.constant 0 : index
    %c0_6 = arith.constant 0 : index
    %6 = vector.load %arg3[%c0_5, %c0_6] : memref<8x128xf32, #tpu.memory_space<vmem>>, vector<8x128xf32>
    tpu.vector_store %arg3[%c0_5, %c0_6], %5 {strides = array<i32>} : memref<8x128xf32, #tpu.memory_space<vmem>>, vector<8x128xf32>,
    return
  }
}

</mosaic_0001>

<llo_original>
// kernel: tpu_custom_call.1
$region0: #{tpu_custom_call.1}
  #allocation0 [shape = 'u32[]', space=smem, size = 0x4, offset = 0x4, fixed_abs, tag = 'smem constant byte address 0x4 - core index']
  #allocation1 [shape = 'u32[72,128]{1,0:T(1,128)}', space=vmem, size = 0x9000, scoped, tag = 'internal scratch']
  %s0 = inlined_call_operand.hbm [shape: f32[8,32], index: 0, kind: input, shape index: {}]
  %s1 = inlined_call_operand.hbm [shape: f32[32,128], index: 1, kind: input, shape index: {}]
  %s2 = inlined_call_operand.vmem [shape: f32[1,128], index: 2, kind: input, shape index: {}]
  %s3 = inlined_call_operand.hbm [shape: f32[8,128], index: 3, kind: output, shape index: {}]
  %s4 = sld [smem:[#allocation0]]
  $region30: #{tpu_custom_call.1} parent=0
    _
  %s6 = ssub.s32 1, %s4
  %s7 = scalar_select 0, %s6, %s4
  $region1: #{tpu_custom_call.1} parent=0
    #allocation2 [shape = 'u8[4096]{0}', space=vmem, size = 0x1000, scoped, tag = 'input window, operand 0, single buffered']
    #allocation3 [shape = 's32[1]{0}', space=sflag, size = 0x4, scoped, tag = 'scoped memory for tpu_custom_call.1']
    #allocation4 [shape = 's32[1]{0}', space=sflag, size = 0x4, scoped, tag = 'scoped memory for tpu_custom_call.1']
    #allocation5 [shape = 'u8[16384]{0}', space=vmem, size = 0x4000, scoped, tag = 'input window, operand 1, single buffered']
    #allocation6 [shape = 's32[1]{0}', space=sflag, size = 0x4, scoped, tag = 'scoped memory for tpu_custom_call.1']
    #allocation7 [shape = 'u8[4096]{0}', space=vmem, size = 0x1000, scoped, tag = 'output window, operand 0, single buffered']
    %8 = vsyncpa [#allocation3], 0
    %9 = vsyncpa [#allocation6], 0
    %10 = vsyncpa [#allocation4], 0
    // Predicated region
    $region2: #{tpu_custom_call.1} parent=1 // pred_check
      _
    $region3: #{tpu_custom_call.1} parent=1 // pred_check_branch
      %12 = sbr.rel (0) target = $region5
    $region4: #{tpu_custom_call.1} parent=1 // pred_region
      %14 = vsyncadd [#allocation3], 0
      %s16 = sshll.u32 %s0, 4
      %s17 = int_to_ptr.hbm [resolvable:$true] %s16
      %s18 = sshll.u32 [#allocation2], 4
      %s19 = int_to_ptr.vmem [resolvable:$true] %s18
      %21 = dma.hbm_to_vmem [thread:$0]  %s17, 128, %s19, [#allocation3]
    $region5: #{tpu_custom_call.1} parent=1 // pred_fallthru
      _
    // Predicated region
    $region6: #{tpu_custom_call.1} parent=1 // pred_check
      _
    $region7: #{tpu_custom_call.1} parent=1 // pred_check_branch
      %23 = sbr.rel (0) target = $region9
    $region8: #{tpu_custom_call.1} parent=1 // pred_region
      %25 = vsyncadd [#allocation6], 0
      %s26 = sshll.u32 %s1, 4
      %s27 = int_to_ptr.hbm [resolvable:$true] %s26
      %s28 = sshll.u32 [#allocation5], 4
      %s29 = int_to_ptr.vmem [resolvable:$true] %s28
      %34 = dma.hbm_to_vmem [thread:$0]  %s27, 512, %s29, [#allocation6], 128, 128, 8
    $region9: #{tpu_custom_call.1} parent=1 // pred_fallthru
      _
    // Predicated region
    $region10: #{tpu_custom_call.1} parent=1 // pred_check
      _
    $region11: #{tpu_custom_call.1} parent=1 // pred_check_branch
      %36 = sbr.rel (0) target = $region13
    $region12: #{tpu_custom_call.1} parent=1 // pred_region
      _
    $region13: #{tpu_custom_call.1} parent=1 // pred_fallthru
      _
    // Predicated region
    $region14: #{tpu_custom_call.1} parent=1 // pred_check
      _
    $region15: #{tpu_custom_call.1} parent=1 // pred_check_branch
      %38 = sbr.rel (0) target = $region17
    $region16: #{tpu_custom_call.1} parent=1 // pred_region
      %40 = dma.done [#allocation3], 128
    $region17: #{tpu_custom_call.1} parent=1 // pred_fallthru
      _
    // Predicated region
    $region18: #{tpu_custom_call.1} parent=1 // pred_check
      _
    $region19: #{tpu_custom_call.1} parent=1 // pred_check_branch
      %42 = sbr.rel (0) target = $region21
    $region20: #{tpu_custom_call.1} parent=1 // pred_region
      %44 = dma.done [#allocation6], 512
    $region21: #{tpu_custom_call.1} parent=1 // pred_fallthru
      _
    %v45 = vld [vmem:[#allocation2] sm:$0xff]
    %v46 = vld [vmem:[#allocation5] sm:$0xff]
    %v47 = vld [vmem:[#allocation5 + $0x8] sm:$0xff]
    %v48 = vld [vmem:[#allocation5 + $0x10] sm:$0xff]
    %v49 = vld [vmem:[#allocation5 + $0x18] sm:$0xff]
    %v50 = vld [vmem:[%s2] sm:$0x1]
    %v52 = vperm.slane %v50, 0
    %vm54 = vcmask 261120
    %v56 = vsel %vm54, %v45, 0
    %58 = vmatpush.msra.mxu0 0.0
    %59 = vmatpush.msra.mxu0 0.0
    %60 = vmatpush.msra.mxu0 0.0
    %61 = vmatpush.msra.mxu0 0.0
    %62 = vmatpush.msra.mxu0 0.0
    %63 = vmatpush.msra.mxu0 0.0
    %64 = vmatpush.msra.mxu0 0.0
    %65 = vmatpush.msra.mxu0 0.0
    %66 = vmatpush.msra.mxu0 0.0
    %67 = vmatpush.msra.mxu0 0.0
    %68 = vmatpush.msra.mxu0 0.0
    %69 = vmatpush.msra.mxu0 0.0
    %70 = vmatpush.msra.mxu0 %v49
    %71 = vmatpush.msra.mxu0 %v48
    %72 = vmatpush.msra.mxu0 %v47
    %73 = vmatpush.msra.mxu0 %v46
    %74 = vmatmul.f32.gmra.mxu0 %v56
    %v75 = vpop.f32.mrf.mxu0
    %v76 = vadd.f32 %v52, %v75
    %77 = vdwg.mxu0
    %78 = vst [vmem:[#allocation7] sm:$0xff] %v76
    // Predicated region
    $region22: #{tpu_custom_call.1} parent=1 // pred_check
      _
    $region23: #{tpu_custom_call.1} parent=1 // pred_check_branch
      %80 = sbr.rel (0) target = $region25
    $region24: #{tpu_custom_call.1} parent=1 // pred_region
      %82 = vsyncadd [#allocation4], 0
      %s84 = sshll.u32 [#allocation7], 4
      %s85 = int_to_ptr.vmem [resolvable:$true] %s84
      %s86 = sshll.u32 %s3, 4
      %s87 = int_to_ptr.hbm [resolvable:$true] %s86
      %89 = dma.vmem_to_hbm [thread:$0]  %s85, 128, %s87, [#allocation4]
    $region25: #{tpu_custom_call.1} parent=1 // pred_fallthru
      _
    // Predicated region
    $region26: #{tpu_custom_call.1} parent=1 // pred_check
      _
    $region27: #{tpu_custom_call.1} parent=1 // pred_check_branch
      %91 = sbr.rel (0) target = $region29
    $region28: #{tpu_custom_call.1} parent=1 // pred_region
      %93 = dma.done [#allocation4], 128
    $region29: #{tpu_custom_call.1} parent=1 // pred_fallthru
      _
    %94 = vsyncpa [#allocation3], 1
    %95 = vsyncpa [#allocation6], 1
    %96 = vsyncpa [#allocation4], 1

</llo_original>
